<compile_context>
chip_gen: v7x
topology: tpu7x:2x2x1
jax: 0.10.0
libtpu: 0.0.40
codegen_flags: <defaults>
</compile_context>

<pallas_src>
import functools

import jax
import jax.numpy as jnp
from jax import lax
from jax.experimental import pallas as pl
from jax.experimental.pallas import tpu as pltpu


# ----------------------------------------------------------------------------
# Kernel 1: fused gather + prompt broadcast + concat
# ----------------------------------------------------------------------------
def _assemble_kernel(ids_ref, table_ref, gen_ref, out_ref, *, prompt_len, vocab):
    # Prompt rows (generator output, identical for every batch row).
    out_ref[0, :prompt_len, :] = gen_ref[...]

    # Token rows: vectorized gather of all L rows at once via a one-hot matmul.
    # (L, 1) ids vs (L, V) iota -> (L, V) one-hot, then (L, V) @ (V, D) on the
    # MXU.  One dense (L, D) store per grid step.
    ids = ids_ref[0]                                            # (L, 1) int32
    seq_len = ids.shape[0]
    token_iota = lax.broadcasted_iota(jnp.int32, (seq_len, vocab), 1)
    onehot = (ids == token_iota).astype(table_ref.dtype)        # (L, V)
    gathered = jnp.dot(onehot, table_ref[...],
                       preferred_element_type=jnp.float32)      # (L, D)
    out_ref[0, prompt_len:, :] = gathered.astype(out_ref.dtype)


def assemble_embeddings(input_ids, embed_table, gen, prompt_len):
    """input_ids: (B, L) int32, embed_table: (V, D), gen: (P, D) -> (B, P+L, D)."""
    b, l = input_ids.shape
    v, d = embed_table.shape
    p = prompt_len

    # Clamp ids (XLA gather clamps; unclamped ids would silently select wrong /
    # no rows).  Trailing singleton dim so the kernel sees an (L, 1) VMEM vector.
    ids3d = jnp.clip(input_ids.astype(jnp.int32), 0, v - 1)[..., None]  # (B, L, 1)

    kernel = functools.partial(_assemble_kernel, prompt_len=p, vocab=v)
    return pl.pallas_call(
        kernel,
        out_shape=jax.ShapeDtypeStruct((b, p + l, d), embed_table.dtype),
        grid=(b,),
        in_specs=[
            pl.BlockSpec((1, l, 1), lambda i: (i, 0, 0)),   # ids for batch row i
            pl.BlockSpec((v, d), lambda i: (0, 0)),         # table resident in VMEM
            pl.BlockSpec((p, d), lambda i: (0, 0)),         # generator output (P, D)
        ],
        out_specs=pl.BlockSpec((1, p + l, d), lambda i: (i, 0, 0)),
        compiler_params=pltpu.CompilerParams(
            # Batch rows are independent -> shard grid across TensorCores (v7x).
            dimension_semantics=("parallel",),
        ),
    )(ids3d, embed_table, gen)


# ----------------------------------------------------------------------------
# Kernel 2: encoder_generator MLP on the prompt embedding row
#   h1  = relu(h0 @ W1 + b1)        h0: (1, E),  W1: (E, E//2)
#   out = h1 @ W2 + b2              W2: (E//2, D*P), tiled over the output dim
# (weights are stored (in, out), i.e. already-transposed vs torch.nn.Linear)
# ----------------------------------------------------------------------------
def _mlp_kernel(h0_ref, w1_ref, b1_ref, w2_ref, b2_ref, out_ref):
    # h1 is tiny ((1, E//2)); recompute per output tile instead of carrying a
    # cross-step scratch accumulator.
    h1 = jnp.dot(h0_ref[...], w1_ref[...], preferred_element_type=jnp.float32)
    h1 = jnp.maximum(h1 + b1_ref[...], 0.0)
    out = jnp.dot(h1, w2_ref[...], preferred_element_type=jnp.float32)
    out_ref[...] = (out + b2_ref[...]).astype(out_ref.dtype)


def _pick_out_tile(out_dim, max_tile=2048):
    """Largest lane-aligned tile (multiple of 128) dividing out_dim, capped."""
    if out_dim % 128 != 0 or out_dim <= max_tile:
        return out_dim
    tile = max_tile
    while out_dim % tile != 0:
        tile -= 128
    return tile


def encoder_generator(h0, w1, b1, w2, b2):
    """h0: (1, E) -> (1, D*P).  Streams W2 / b2 / out in output-dim tiles."""
    e, hid = w1.shape
    out_dim = w2.shape[1]
    tn = _pick_out_tile(out_dim)
    return pl.pallas_call(
        _mlp_kernel,
        out_shape=jax.ShapeDtypeStruct((1, out_dim), jnp.float32),
        grid=(out_dim // tn,),
        in_specs=[
            pl.BlockSpec((1, e), lambda j: (0, 0)),
            pl.BlockSpec((e, hid), lambda j: (0, 0)),
            pl.BlockSpec((1, hid), lambda j: (0, 0)),
            pl.BlockSpec((hid, tn), lambda j: (0, j)),   # stream W2 column tiles
            pl.BlockSpec((1, tn), lambda j: (0, j)),
        ],
        out_specs=pl.BlockSpec((1, tn), lambda j: (0, j)),
        compiler_params=pltpu.CompilerParams(
            dimension_semantics=("parallel",),
        ),
    )(h0, w1, b1, w2, b2)


# ----------------------------------------------------------------------------
# Full module forward
# ----------------------------------------------------------------------------
def reparameterized_input_processor(
    input_ids,            # (B, L) int32
    attention_mask,       # (B, L) float32
    embed_table,          # (V, D) float32          -- self.embeddings
    prompt_embed,         # (1, E) float32          -- encoder_prompt_embeddings
    w1, b1, w2, b2,       # generator MLP params
    prompt_length,        # P
):
    b, l = input_ids.shape
    d = embed_table.shape[1]

    # The prompt id is always 0, so the generator output is batch-independent:
    # compute it once (per forward; cacheable per weight version in serving)
    # and let the assemble kernel broadcast it across batch rows.
    gen = encoder_generator(prompt_embed, w1, b1, w2, b2)            # (1, P*D)
    gen = gen.reshape(prompt_length, d).astype(embed_table.dtype)    # (P, D)

    # Fused gather + broadcast + concat: writes (B, P+L, D) exactly once.
    final_embeddings = assemble_embeddings(input_ids, embed_table, gen,
                                           prompt_length)            # (B, P+L, D)

    # Mask construction is tiny glue; keep in plain JAX.
    final_attention_mask = jnp.concatenate(
        [jnp.ones((b, prompt_length), jnp.float32),
         attention_mask.astype(jnp.float32)],
        axis=1,
    )                                                                # (B, P+L)
    return final_embeddings, final_attention_mask


# ----------------------------------------------------------------------------
# Pure-JAX reference for correctness check
# ----------------------------------------------------------------------------
def _reference(input_ids, attention_mask, embed_table, prompt_embed,
               w1, b1, w2, b2, prompt_length):
    b, l = input_ids.shape
    d = embed_table.shape[1]
    inp = embed_table[input_ids]                                     # (B, L, D)
    h1 = jnp.maximum(prompt_embed @ w1 + b1, 0.0)
    gen = (h1 @ w2 + b2).reshape(1, prompt_length, d)
    gen = jnp.broadcast_to(gen, (b, prompt_length, d))
    emb = jnp.concatenate([gen, inp], axis=1)
    msk = jnp.concatenate(
        [jnp.ones((b, prompt_length), jnp.float32), attention_mask], axis=1)
    return emb, msk


if __name__ == "__main__":
    # Small, deterministic config
    B, L = 2, 8              # batch, input sequence length
    V, D = 64, 32            # vocab size, model embedding_dim
    E = 32                   # encoder_embedding_dim (encoder_config.n_embd)
    P = 4                    # prompt_length
    H = E // 2               # generator hidden

    key = jax.random.PRNGKey(0)
    k = jax.random.split(key, 8)

    embed_table  = jax.random.normal(k[0], (V, D), jnp.float32) * 0.02
    prompt_embed = jax.random.normal(k[1], (1, E), jnp.float32) * 0.02
    w1 = jax.random.normal(k[2], (E, H), jnp.float32) * 0.1
    b1 = jax.random.normal(k[3], (1, H), jnp.float32) * 0.1
    w2 = jax.random.normal(k[4], (H, D * P), jnp.float32) * 0.1
    b2 = jax.random.normal(k[5], (1, D * P), jnp.float32) * 0.1

    input_ids = jax.random.randint(k[6], (B, L), 0, V, jnp.int32)
    attention_mask = jnp.ones((B, L), jnp.float32)

    emb, msk = reparameterized_input_processor(
        input_ids, attention_mask, embed_table, prompt_embed,
        w1, b1, w2, b2, P)
    emb = jax.block_until_ready(emb)
    msk = jax.block_until_ready(msk)

    ref_emb, ref_msk = _reference(
        input_ids, attention_mask, embed_table, prompt_embed,
        w1, b1, w2, b2, P)

    assert emb.shape == (B, P + L, D), emb.shape
    assert msk.shape == (B, P + L), msk.shape
    assert jnp.allclose(emb, ref_emb, atol=1e-5, rtol=1e-5)
    assert jnp.allclose(msk, ref_msk)

    print("KERNEL_OK")
</pallas_src>

<mosaic_0001>
module attributes {stable_mosaic.version = 11 : i64} {
  func.func @_mlp_kernel(%arg0: i32, %arg1: memref<1x32xf32, #tpu.memory_space<vmem>>, %arg2: memref<32x16xf32, #tpu.memory_space<vmem>>, %arg3: memref<1x16xf32, #tpu.memory_space<vmem>>, %arg4: memref<16x128xf32, #tpu.memory_space<vmem>>, %arg5: memref<1x128xf32, #tpu.memory_space<vmem>>, %arg6: memref<1x128xf32, #tpu.memory_space<vmem>>) attributes {dimension_semantics = [#tpu.dimension_semantics<parallel>], iteration_bounds = array<i64: 1>, scalar_prefetch = 0 : i64, scratch_operands = 0 : i64, tpu.core_type = #tpu.core_type<tc>, window_params = [{pipeline_mode = #tpu.pipeline_mode<synchronous>, transform_indices = @transform_0, window_bounds = array<i64: 1, 32>}, {pipeline_mode = #tpu.pipeline_mode<synchronous>, transform_indices = @transform_1, window_bounds = array<i64: 32, 16>}, {pipeline_mode = #tpu.pipeline_mode<synchronous>, transform_indices = @transform_2, window_bounds = array<i64: 1, 16>}, {transform_indices = @transform_3, window_bounds = array<i64: 16, 128>}, {transform_indices = @transform_4, window_bounds = array<i64: 1, 128>}, {transform_indices = @transform_5, window_bounds = array<i64: 1, 128>}]} {
    %c0 = arith.constant 0 : index
    %c0_0 = arith.constant 0 : index
    %0 = vector.load %arg1[%c0, %c0_0] : memref<1x32xf32, #tpu.memory_space<vmem>>, vector<1x32xf32>
    %c0_1 = arith.constant 0 : index
    %c0_2 = arith.constant 0 : index
    %1 = vector.load %arg2[%c0_1, %c0_2] : memref<32x16xf32, #tpu.memory_space<vmem>>, vector<32x16xf32>
    %cst = arith.constant dense<0.000000e+00> : vector<1x16xf32>
    %2 = tpu.matmul %0, %1, %cst {dimension_numbers = #tpu.dot_dimension_numbers<[1], [0], [0], [1], [0, 0, 1, 1], [], []>} : vector<1x32xf32>, vector<32x16xf32>, vector<1x16xf32> -> vector<1x16xf32>
    %c0_3 = arith.constant 0 : index
    %c0_4 = arith.constant 0 : index
    %3 = vector.load %arg3[%c0_3, %c0_4] : memref<1x16xf32, #tpu.memory_space<vmem>>, vector<1x16xf32>
    %4 = arith.addf %2, %3 : vector<1x16xf32>
    %cst_5 = arith.constant 0.000000e+00 : f32
    %5 = vector.broadcast %cst_5 : f32 to vector<1x16xf32>
    %6 = arith.maximumf %4, %5 : vector<1x16xf32>
    %c0_6 = arith.constant 0 : index
    %c0_7 = arith.constant 0 : index
    %7 = vector.load %arg4[%c0_6, %c0_7] : memref<16x128xf32, #tpu.memory_space<vmem>>, vector<16x128xf32>
    %cst_8 = arith.constant dense<0.000000e+00> : vector<1x128xf32>
    %8 = tpu.matmul %6, %7, %cst_8 {dimension_numbers = #tpu.dot_dimension_numbers<[1], [0], [0], [1], [0, 0, 1, 1], [], []>} : vector<1x16xf32>, vector<16x128xf32>, vector<1x128xf32> -> vector<1x128xf32>
    %c0_9 = arith.constant 0 : index
    %c0_10 = arith.constant 0 : index
    %9 = vector.load %arg5[%c0_9, %c0_10] : memref<1x128xf32, #tpu.memory_space<vmem>>, vector<1x128xf32>
    %10 = arith.addf %8, %9 : vector<1x128xf32>
    %c0_11 = arith.constant 0 : index
    %c0_12 = arith.constant 0 : index
    %11 = vector.load %arg6[%c0_11, %c0_12] : memref<1x128xf32, #tpu.memory_space<vmem>>, vector<1x128xf32>
    tpu.vector_store %arg6[%c0_11, %c0_12], %10 {strides = array<i32>} : memref<1x128xf32, #tpu.memory_space<vmem>>, vector<1x128xf32>,
    return
  }
  func.func @transform_0(%arg0: i32) -> (i32, i32) {
    %c0_i32 = arith.constant 0 : i32
    %c0_i32_0 = arith.constant 0 : i32
    %c0_i32_1 = arith.constant 0 : i32
    return %c0_i32, %c0_i32_0 : i32, i32
  }
  func.func @transform_1(%arg0: i32) -> (i32, i32) {
    %c0_i32 = arith.constant 0 : i32
    %c0_i32_0 = arith.constant 0 : i32
    %c0_i32_1 = arith.constant 0 : i32
    return %c0_i32, %c0_i32_0 : i32, i32
  }
  func.func @transform_2(%arg0: i32) -> (i32, i32) {
    %c0_i32 = arith.constant 0 : i32
    %c0_i32_0 = arith.constant 0 : i32
    %c0_i32_1 = arith.constant 0 : i32
    return %c0_i32, %c0_i32_0 : i32, i32
  }
  func.func @transform_3(%arg0: i32) -> (i32, i32) {
    %c0_i32 = arith.constant 0 : i32
    %c0_i32_0 = arith.constant 0 : i32
    return %c0_i32, %arg0 : i32, i32
  }
  func.func @transform_4(%arg0: i32) -> (i32, i32) {
    %c0_i32 = arith.constant 0 : i32
    %c0_i32_0 = arith.constant 0 : i32
    return %c0_i32, %arg0 : i32, i32
  }
  func.func @transform_5(%arg0: i32) -> (i32, i32) {
    %c0_i32 = arith.constant 0 : i32
    %c0_i32_0 = arith.constant 0 : i32
    return %c0_i32, %arg0 : i32, i32
  }
}

</mosaic_0001>

<llo_original>
// kernel: tpu_custom_call.1
$region0: #{tpu_custom_call.1}
  #allocation0 [shape = 'u32[]', space=smem, size = 0x4, offset = 0x4, fixed_abs, tag = 'smem constant byte address 0x4 - core index']
  #allocation1 [shape = 'u32[144,128]{1,0:T(1,128)}', space=vmem, size = 0x12000, scoped, tag = 'internal scratch']
  %s0 = inlined_call_operand.vmem [shape: f32[1,32], index: 0, kind: input, shape index: {}]
  %s1 = inlined_call_operand.vmem [shape: f32[32,16], index: 1, kind: input, shape index: {}]
  %s2 = inlined_call_operand.vmem [shape: f32[1,16], index: 2, kind: input, shape index: {}]
  %s3 = inlined_call_operand.vmem [shape: f32[16,128], index: 3, kind: input, shape index: {}]
  %s4 = inlined_call_operand.vmem [shape: f32[1,128], index: 4, kind: input, shape index: {}]
  %s5 = inlined_call_operand.hbm [shape: f32[1,128], index: 5, kind: output, shape index: {}]
  %s6 = sld [smem:[#allocation0]]
  $region30: #{tpu_custom_call.1} parent=0
    _
  %s8 = ssub.s32 1, %s6
  %s9 = scalar_select 0, %s8, %s6
  $region1: #{tpu_custom_call.1} parent=0
    #allocation2 [shape = 'u8[512]{0}', space=vmem, size = 0x400, scoped, tag = 'output window, operand 0, single buffered']
    #allocation3 [shape = 's32[1]{0}', space=sflag, size = 0x4, scoped, tag = 'scoped memory for tpu_custom_call.1']
    %10 = vsyncpa [#allocation3], 0
    // Predicated region
    $region2: #{tpu_custom_call.1} parent=1 // pred_check
      _
    $region3: #{tpu_custom_call.1} parent=1 // pred_check_branch
      %12 = sbr.rel (0) target = $region5
    $region4: #{tpu_custom_call.1} parent=1 // pred_region
      _
    $region5: #{tpu_custom_call.1} parent=1 // pred_fallthru
      _
    // Predicated region
    $region6: #{tpu_custom_call.1} parent=1 // pred_check
      _
    $region7: #{tpu_custom_call.1} parent=1 // pred_check_branch
      %14 = sbr.rel (0) target = $region9
    $region8: #{tpu_custom_call.1} parent=1 // pred_region
      _
    $region9: #{tpu_custom_call.1} parent=1 // pred_fallthru
      _
    // Predicated region
    $region10: #{tpu_custom_call.1} parent=1 // pred_check
      _
    $region11: #{tpu_custom_call.1} parent=1 // pred_check_branch
      %16 = sbr.rel (0) target = $region13
    $region12: #{tpu_custom_call.1} parent=1 // pred_region
      _
    $region13: #{tpu_custom_call.1} parent=1 // pred_fallthru
      _
    // Predicated region
    $region14: #{tpu_custom_call.1} parent=1 // pred_check
      _
    $region15: #{tpu_custom_call.1} parent=1 // pred_check_branch
      %18 = sbr.rel (0) target = $region17
    $region16: #{tpu_custom_call.1} parent=1 // pred_region
      _
    $region17: #{tpu_custom_call.1} parent=1 // pred_fallthru
      _
    // Predicated region
    $region18: #{tpu_custom_call.1} parent=1 // pred_check
      _
    $region19: #{tpu_custom_call.1} parent=1 // pred_check_branch
      %20 = sbr.rel (0) target = $region21
    $region20: #{tpu_custom_call.1} parent=1 // pred_region
      _
    $region21: #{tpu_custom_call.1} parent=1 // pred_fallthru
      _
    %v21 = vld [vmem:[%s0] sm:$0x1]
    %v22 = vld [vmem:[%s1] sm:$0xff]
    %v23 = vld [vmem:[%s1 + $0x8] sm:$0xff]
    %v24 = vld [vmem:[%s1 + $0x10] sm:$0xff]
    %v25 = vld [vmem:[%s1 + $0x18] sm:$0xff]
    %v26 = vld [vmem:[%s2] sm:$0x1]
    %vm27 = vcmask 261120
    %v29 = vsel %vm27, %v21, 0
    %31 = vmatprep.subr.mxu0 0.0
    %32 = vmatpush1.msra.mxu0 %v22
    %33 = vmatprep.subr.mxu0 0.0
    %34 = vmatpush1.msra.mxu0 %v23
    %35 = vmatprep.subr.mxu0 0.0
    %36 = vmatpush1.msra.mxu0 %v24
    %37 = vmatprep.subr.mxu0 0.0
    %38 = vmatpush1.msra.mxu0 %v25
    %39 = vmatprep.subr.mxu0 0.0
    %40 = vmatpush1.msra.mxu0 0.0
    %41 = vmatprep.subr.mxu0 0.0
    %42 = vmatpush1.msra.mxu0 0.0
    %43 = vmatprep.subr.mxu0 0.0
    %44 = vmatpush1.msra.mxu0 0.0
    %45 = vmatprep.subr.mxu0 0.0
    %46 = vmatpush1.msra.mxu0 0.0
    %47 = vmatprep.subr.mxu0 0.0
    %48 = vmatpush1.msra.mxu0 0.0
    %49 = vmatprep.subr.mxu0 0.0
    %50 = vmatpush1.msra.mxu0 0.0
    %51 = vmatprep.subr.mxu0 0.0
    %52 = vmatpush1.msra.mxu0 0.0
    %53 = vmatprep.subr.mxu0 0.0
    %54 = vmatpush1.msra.mxu0 0.0
    %55 = vmatprep.subr.mxu0 0.0
    %56 = vmatpush1.msra.mxu0 0.0
    %57 = vmatprep.subr.mxu0 0.0
    %58 = vmatpush1.msra.mxu0 0.0
    %59 = vmatprep.subr.mxu0 0.0
    %60 = vmatpush1.msra.mxu0 0.0
    %61 = vmatprep.subr.mxu0 0.0
    %62 = vmatpush1.msra.mxu0 0.0
    %63 = vmatprep.subr.mxu0 0.0
    %64 = vmatpush1.msra.mxu0 0.0
    %65 = vmatprep.subr.mxu0 0.0
    %66 = vmatpush1.msra.mxu0 0.0
    %67 = vmatprep.subr.mxu0 0.0
    %68 = vmatpush1.msra.mxu0 0.0
    %69 = vmatprep.subr.mxu0 0.0
    %70 = vmatpush1.msra.mxu0 0.0
    %71 = vmatprep.subr.mxu0 0.0
    %72 = vmatpush1.msra.mxu0 0.0
    %73 = vmatprep.subr.mxu0 0.0
    %74 = vmatpush1.msra.mxu0 0.0
    %75 = vmatprep.subr.mxu0 0.0
    %76 = vmatpush1.msra.mxu0 0.0
    %77 = vmatprep.subr.mxu0 0.0
    %78 = vmatpush1.msra.mxu0 0.0
    %79 = vmatprep.subr.mxu0 0.0
    %80 = vmatpush1.msra.mxu0 0.0
    %81 = vmatprep.subr.mxu0 0.0
    %82 = vmatpush1.msra.mxu0 0.0
    %83 = vmatprep.subr.mxu0 0.0
    %84 = vmatpush1.msra.mxu0 0.0
    %85 = vmatprep.subr.mxu0 0.0
    %86 = vmatpush1.msra.mxu0 0.0
    %87 = vmatprep.subr.mxu0 0.0
    %88 = vmatpush1.msra.mxu0 0.0
    %89 = vmatprep.subr.mxu0 0.0
    %90 = vmatpush1.msra.mxu0 0.0
    %91 = vmatprep.subr.mxu0 0.0
    %92 = vmatpush1.msra.mxu0 0.0
    %93 = vmatprep.subr.mxu0 0.0
    %94 = vmatpush1.msra.mxu0 0.0
    %95 = vmatprep.mubr.f32.mxu0 0.0
    %96 = vmatmul.mubr.f32.gmra.mrb[0].mxu0 %v29
    %v97 = vpop.f32.mrb[0].mxu0
    %v98 = vadd.f32 %v26, %v97
    %v99 = vpop.f32.mrb[0].mxu0
    %100 = vdwg.mxu0
    %v101 = vmax.f32 %v98, 0.0
    %v102 = vld [vmem:[%s3] sm:$0xff]
    %v103 = vld [vmem:[%s3 + $0x8] sm:$0xff]
    %v104 = vld [vmem:[%s4] sm:$0x1]
    %vm105 = vcmask 130048
    %v107 = vsel %vm105, %v101, 0
    %109 = vmatprep.subr.mxu0 0.0
    %110 = vmatpush1.msra.mxu0 %v102
    %111 = vmatprep.subr.mxu0 0.0
    %112 = vmatpush1.msra.mxu0 %v103
    %113 = vmatprep.subr.mxu0 0.0
    %114 = vmatpush1.msra.mxu0 0.0
    %115 = vmatprep.subr.mxu0 0.0
    %116 = vmatpush1.msra.mxu0 0.0
    %117 = vmatprep.subr.mxu0 0.0
    %118 = vmatpush1.msra.mxu0 0.0
    %119 = vmatprep.subr.mxu0 0.0
    %120 = vmatpush1.msra.mxu0 0.0
    %121 = vmatprep.subr.mxu0 0.0
    %122 = vmatpush1.msra.mxu0 0.0
    %123 = vmatprep.subr.mxu0 0.0
    %124 = vmatpush1.msra.mxu0 0.0
    %125 = vmatprep.subr.mxu0 0.0
    %126 = vmatpush1.msra.mxu0 0.0
    %127 = vmatprep.subr.mxu0 0.0
    %128 = vmatpush1.msra.mxu0 0.0
    %129 = vmatprep.subr.mxu0 0.0
    %130 = vmatpush1.msra.mxu0 0.0
    %131 = vmatprep.subr.mxu0 0.0
    %132 = vmatpush1.msra.mxu0 0.0
    %133 = vmatprep.subr.mxu0 0.0
    %134 = vmatpush1.msra.mxu0 0.0
    %135 = vmatprep.subr.mxu0 0.0
    %136 = vmatpush1.msra.mxu0 0.0
    %137 = vmatprep.subr.mxu0 0.0
    %138 = vmatpush1.msra.mxu0 0.0
    %139 = vmatprep.subr.mxu0 0.0
    %140 = vmatpush1.msra.mxu0 0.0
    %141 = vmatprep.subr.mxu0 0.0
    %142 = vmatpush1.msra.mxu0 0.0
    %143 = vmatprep.subr.mxu0 0.0
    %144 = vmatpush1.msra.mxu0 0.0
    %145 = vmatprep.subr.mxu0 0.0
    %146 = vmatpush1.msra.mxu0 0.0
    %147 = vmatprep.subr.mxu0 0.0
    %148 = vmatpush1.msra.mxu0 0.0
    %149 = vmatprep.subr.mxu0 0.0
    %150 = vmatpush1.msra.mxu0 0.0
    %151 = vmatprep.subr.mxu0 0.0
    %152 = vmatpush1.msra.mxu0 0.0
    %153 = vmatprep.subr.mxu0 0.0
    %154 = vmatpush1.msra.mxu0 0.0
    %155 = vmatprep.subr.mxu0 0.0
    %156 = vmatpush1.msra.mxu0 0.0
    %157 = vmatprep.subr.mxu0 0.0
    %158 = vmatpush1.msra.mxu0 0.0
    %159 = vmatprep.subr.mxu0 0.0
    %160 = vmatpush1.msra.mxu0 0.0
    %161 = vmatprep.subr.mxu0 0.0
    %162 = vmatpush1.msra.mxu0 0.0
    %163 = vmatprep.subr.mxu0 0.0
    %164 = vmatpush1.msra.mxu0 0.0
    %165 = vmatprep.subr.mxu0 0.0
    %166 = vmatpush1.msra.mxu0 0.0
    %167 = vmatprep.subr.mxu0 0.0
    %168 = vmatpush1.msra.mxu0 0.0
    %169 = vmatprep.subr.mxu0 0.0
    %170 = vmatpush1.msra.mxu0 0.0
    %171 = vmatprep.subr.mxu0 0.0
    %172 = vmatpush1.msra.mxu0 0.0
    %173 = vmatprep.mubr.f32.mxu0 0.0
    %174 = vmatmul.mubr.f32.gmra.mrb[0].mxu0 %v107
    %v175 = vpop.f32.mrb[0].mxu0
    %v176 = vadd.f32 %v104, %v175
    %v177 = vpop.f32.mrb[0].mxu0
    %178 = vdwg.mxu0
    %179 = vst [vmem:[#allocation2] sm:$0x1] %v176
    // Predicated region
    $region22: #{tpu_custom_call.1} parent=1 // pred_check
      _
    $region23: #{tpu_custom_call.1} parent=1 // pred_check_branch
      %181 = sbr.rel (0) target = $region25
    $region24: #{tpu_custom_call.1} parent=1 // pred_region
      %s183 = ssub.s32 16, 16
      %184 = vsyncadd [#allocation3], %s183
      %s186 = sshll.u32 [#allocation2], 4
      %s187 = int_to_ptr.vmem [resolvable:$true] %s186
      %189 = dma.vmem_to_hbm [thread:$0]  %s187, 16, %s5, [#allocation3]
    $region25: #{tpu_custom_call.1} parent=1 // pred_fallthru
      _
    // Predicated region
    $region26: #{tpu_custom_call.1} parent=1 // pred_check
      _
    $region27: #{tpu_custom_call.1} parent=1 // pred_check_branch
      %191 = sbr.rel (0) target = $region29
    $region28: #{tpu_custom_call.1} parent=1 // pred_region
      %192 = dma.done [#allocation3], 16
    $region29: #{tpu_custom_call.1} parent=1 // pred_fallthru
      _
    %193 = vsyncpa [#allocation3], 1

</llo_original>
